<compile_context>
chip_gen: v5e
topology: v5e:2x2
jax: 0.10.0
libtpu: 0.0.40
codegen_flags: <defaults>
</compile_context>

<pallas_src>
import functools

import jax
import jax.numpy as jnp
from jax.experimental import pallas as pl
from jax.experimental.pallas import tpu as pltpu

NEG_SLOPE = 0.01          # nn.LeakyReLU default negative_slope
FUSED_MAX_NPAD = 1024     # fused (VMEM-resident adjacency) path threshold
TILE = 1024               # lane/reduction tile for the streamed path


def _round_up(x, m):
    return (x + m - 1) // m * m


def _leaky(v):
    return jnp.where(v >= 0, v, NEG_SLOPE * v)


# ---------------------------------------------------------------------------
# Fused path: whole forward in one kernel; adjacency resident in VMEM (f32).
# Channel-major: activations are (channels, nodes); A_hat is symmetric so
# (A @ H)^T = H^T @ A and no transpose is materialized.
# ---------------------------------------------------------------------------
def _fused_kernel(adj_ref, xT_ref, poolT_ref,
                  w1T_ref, b1_ref, w2T_ref, b2_ref, w3T_ref, b3_ref,
                  woT_ref, bo_ref,
                  logits_ref, probs_ref, embT_ref):
    adj = adj_ref[...]                                  # (n_pad, n_pad) f32
    xT = xT_ref[...]                                    # (F, n_pad) f32
    # Aggregate-then-transform: the N^2 matmul contracts over channels (small).
    h = _leaky(jnp.dot(w1T_ref[...],
                       jnp.dot(xT, adj, preferred_element_type=jnp.float32),
                       preferred_element_type=jnp.float32) + b1_ref[...])
    h = _leaky(jnp.dot(w2T_ref[...],
                       jnp.dot(h, adj, preferred_element_type=jnp.float32),
                       preferred_element_type=jnp.float32) + b2_ref[...])
    h = jnp.dot(w3T_ref[...],
                jnp.dot(h, adj, preferred_element_type=jnp.float32),
                preferred_element_type=jnp.float32) + b3_ref[...]   # no act
    logits = jnp.dot(woT_ref[...], h,
                     preferred_element_type=jnp.float32) + bo_ref[...]
    logits_ref[...] = logits
    m = jnp.max(logits, axis=0, keepdims=True)
    e = jnp.exp(logits - m)
    probs_ref[...] = e / jnp.sum(e, axis=0, keepdims=True)   # exact normalization
    # embeds^T = X^T @ pool^T   -> (F, C); transposed back in the wrapper.
    embT_ref[...] = jnp.dot(xT, poolT_ref[...], preferred_element_type=jnp.float32)


def _fused_forward(adj_p, xT, poolT, w1T, b1, w2T, b2, w3T, b3, woT, bo):
    f, n_pad = xT.shape
    c = woT.shape[0]
    return pl.pallas_call(
        _fused_kernel,
        out_shape=(jax.ShapeDtypeStruct((c, n_pad), jnp.float32),
                   jax.ShapeDtypeStruct((c, n_pad), jnp.float32),
                   jax.ShapeDtypeStruct((f, c), jnp.float32)),
    )(adj_p, xT, poolT, w1T, b1, w2T, b2, w3T, b3, woT, bo)


# ---------------------------------------------------------------------------
# Tiled path (large N): one GCN layer, channel-major.
#   out_T[:, j] = LeakyReLU( W^T @ (H_T @ A)[:, j] + b )
# grid = (j: node-column tiles [parallel], k: node reduction tiles [arbitrary]).
# H_T is VMEM-resident across j; adjacency streams in bf16 tiles, cast to f32
# inside the kernel (f32 MXU is hidden under the HBM-bound adjacency stream).
# ---------------------------------------------------------------------------
def _gcn_layer_kernel(h_ref, adj_ref, wT_ref, b_ref, out_ref, acc_ref):
    k = pl.program_id(1)
    tk = adj_ref.shape[0]

    @pl.when(k == 0)
    def _init():
        acc_ref[...] = jnp.zeros_like(acc_ref)

    start = pl.multiple_of(k * tk, 128)
    h_blk = h_ref[:, pl.ds(start, tk)].astype(jnp.float32)      # (cin, tk)
    acc_ref[...] += jnp.dot(h_blk, adj_ref[...].astype(jnp.float32),
                            preferred_element_type=jnp.float32)

    @pl.when(k == pl.num_programs(1) - 1)
    def _finalize():
        z = jnp.dot(wT_ref[...], acc_ref[...],
                    preferred_element_type=jnp.float32) + b_ref[...]   # f32
        out_ref[...] = _leaky(z).astype(out_ref.dtype)


def _gcn_layer(hT_bf, adj_bf, wT, b_col, *, tn, tk):
    cin, n_pad = hT_bf.shape
    cout = wT.shape[0]
    grid = (n_pad // tn, n_pad // tk)
    return pl.pallas_call(
        _gcn_layer_kernel,
        out_shape=jax.ShapeDtypeStruct((cout, n_pad), jnp.bfloat16),
        grid_spec=pltpu.PrefetchScalarGridSpec(
            num_scalar_prefetch=0,
            grid=grid,
            in_specs=[
                pl.BlockSpec((cin, n_pad), lambda j, k: (0, 0)),  # H_T resident
                pl.BlockSpec((tk, tn), lambda j, k: (k, j)),      # adjacency tile
                pl.BlockSpec((cout, cin), lambda j, k: (0, 0)),   # W^T (f32, full)
                pl.BlockSpec((cout, 1), lambda j, k: (0, 0)),     # bias column
            ],
            out_specs=pl.BlockSpec((cout, tn), lambda j, k: (0, j)),
            scratch_shapes=[pltpu.VMEM((cin, tn), jnp.float32)],
        ),
        compiler_params=pltpu.CompilerParams(
            dimension_semantics=("parallel", "arbitrary"),
            vmem_limit_bytes=32 * 1024 * 1024),
    )(hT_bf, adj_bf, wT, b_col)


# Last layer (no activation) with the output head fused into the finalize
# branch: logits_T = Wo^T @ (W3^T @ (H_T @ A) + b3) + bo ; softmax over classes.
def _gcn_last_head_kernel(h_ref, adj_ref, w3T_ref, b3_ref, woT_ref, bo_ref,
                          logits_ref, probs_ref, acc_ref):
    k = pl.program_id(1)
    tk = adj_ref.shape[0]

    @pl.when(k == 0)
    def _init():
        acc_ref[...] = jnp.zeros_like(acc_ref)

    start = pl.multiple_of(k * tk, 128)
    h_blk = h_ref[:, pl.ds(start, tk)].astype(jnp.float32)
    acc_ref[...] += jnp.dot(h_blk, adj_ref[...].astype(jnp.float32),
                            preferred_element_type=jnp.float32)

    @pl.when(k == pl.num_programs(1) - 1)
    def _finalize():
        z = jnp.dot(w3T_ref[...], acc_ref[...],
                    preferred_element_type=jnp.float32) + b3_ref[...]   # no act
        logits = jnp.dot(woT_ref[...], z,
                         preferred_element_type=jnp.float32) + bo_ref[...]
        logits_ref[...] = logits
        m = jnp.max(logits, axis=0, keepdims=True)
        e = jnp.exp(logits - m)
        probs_ref[...] = e / jnp.sum(e, axis=0, keepdims=True)


def _gcn_last_layer_head(hT_bf, adj_bf, w3T, b3, woT, bo, *, tn, tk):
    cin, n_pad = hT_bf.shape
    cout = w3T.shape[0]
    c = woT.shape[0]
    grid = (n_pad // tn, n_pad // tk)
    return pl.pallas_call(
        _gcn_last_head_kernel,
        out_shape=(jax.ShapeDtypeStruct((c, n_pad), jnp.float32),
                   jax.ShapeDtypeStruct((c, n_pad), jnp.float32)),
        grid_spec=pltpu.PrefetchScalarGridSpec(
            num_scalar_prefetch=0,
            grid=grid,
            in_specs=[
                pl.BlockSpec((cin, n_pad), lambda j, k: (0, 0)),  # H_T resident
                pl.BlockSpec((tk, tn), lambda j, k: (k, j)),      # adjacency tile
                pl.BlockSpec((cout, cin), lambda j, k: (0, 0)),   # W3^T
                pl.BlockSpec((cout, 1), lambda j, k: (0, 0)),     # b3
                pl.BlockSpec((c, cout), lambda j, k: (0, 0)),     # Wo^T
                pl.BlockSpec((c, 1), lambda j, k: (0, 0)),        # bo
            ],
            out_specs=(pl.BlockSpec((c, tn), lambda j, k: (0, j)),
                       pl.BlockSpec((c, tn), lambda j, k: (0, j))),
            scratch_shapes=[pltpu.VMEM((cin, tn), jnp.float32)],
        ),
        compiler_params=pltpu.CompilerParams(
            dimension_semantics=("parallel", "arbitrary"),
            vmem_limit_bytes=32 * 1024 * 1024),
    )(hT_bf, adj_bf, w3T, b3, woT, bo)


# embeds = pool @ X  (segment-mean pooling), tiled over the node axis.
def _pool_kernel(pool_ref, x_ref, out_ref):
    @pl.when(pl.program_id(0) == 0)
    def _init():
        out_ref[...] = jnp.zeros_like(out_ref)

    out_ref[...] += jnp.dot(pool_ref[...], x_ref[...],
                            preferred_element_type=jnp.float32)


def _embeds(pool_pad, x_pad, *, tk):
    k_rows, n_pad = pool_pad.shape
    f = x_pad.shape[1]
    grid = (n_pad // tk,)
    return pl.pallas_call(
        _pool_kernel,
        out_shape=jax.ShapeDtypeStruct((k_rows, f), jnp.float32),
        grid_spec=pltpu.PrefetchScalarGridSpec(
            num_scalar_prefetch=0,
            grid=grid,
            in_specs=[
                pl.BlockSpec((k_rows, tk), lambda k: (0, k)),
                pl.BlockSpec((tk, f), lambda k: (k, 0)),
            ],
            out_specs=pl.BlockSpec((k_rows, f), lambda k: (0, 0)),
        ),
        compiler_params=pltpu.CompilerParams(dimension_semantics=("arbitrary",)),
    )(pool_pad, x_pad)


# ---------------------------------------------------------------------------
# Once-per-graph layout plumbing (hoisted out of the jitted forward).
# ---------------------------------------------------------------------------
def prepare_graph(adj_hat, n):
    if _round_up(n, 128) <= FUSED_MAX_NPAD:
        n_pad = _round_up(n, 128)
        adj_p = jnp.zeros((n_pad, n_pad), jnp.float32).at[:n, :n].set(adj_hat)
        return dict(mode="fused", adj=adj_p)
    n_pad = _round_up(n, TILE)
    adj_p = (jnp.zeros((n_pad, n_pad), jnp.float32)
             .at[:n, :n].set(adj_hat).astype(jnp.bfloat16))
    return dict(mode="tiled", adj=adj_p)


# ---------------------------------------------------------------------------
# Jitted forwards.
# ---------------------------------------------------------------------------
@jax.jit
def _forward_fused(adj_p, x, params, pool):
    n, f = x.shape
    n_pad = adj_p.shape[0]
    k_rows = pool.shape[0]

    x_pad = jnp.zeros((n_pad, f), jnp.float32).at[:n, :].set(x)
    xT = x_pad.T                                                  # (F, n_pad)
    poolT = jnp.zeros((n_pad, k_rows), jnp.float32).at[:n, :].set(pool.T)

    w1T = params["w1"].T.astype(jnp.float32)
    w2T = params["w2"].T.astype(jnp.float32)
    w3T = params["w3"].T.astype(jnp.float32)
    woT = params["wo"].T.astype(jnp.float32)
    b1 = params["b1"].reshape(-1, 1).astype(jnp.float32)
    b2 = params["b2"].reshape(-1, 1).astype(jnp.float32)
    b3 = params["b3"].reshape(-1, 1).astype(jnp.float32)
    bo = params["bo"].reshape(-1, 1).astype(jnp.float32)

    logits_t, probs_t, emb_t = _fused_forward(
        adj_p, xT, poolT, w1T, b1, w2T, b2, w3T, b3, woT, bo)
    return dict(logits=logits_t.T[:n], probs=probs_t.T[:n], embeds=emb_t.T)


@jax.jit
def _forward_tiled(adj_bf, x, params, pool):
    n, f = x.shape
    n_pad = adj_bf.shape[0]
    k_rows = pool.shape[0]
    tn = tk = TILE

    x_pad = jnp.zeros((n_pad, f), jnp.float32).at[:n, :].set(x)
    xT_bf = x_pad.T.astype(jnp.bfloat16)                          # (F, n_pad)
    pool_pad = jnp.zeros((k_rows, n_pad), jnp.float32).at[:, :n].set(pool)

    w1T = params["w1"].T.astype(jnp.float32)
    w2T = params["w2"].T.astype(jnp.float32)
    w3T = params["w3"].T.astype(jnp.float32)
    woT = params["wo"].T.astype(jnp.float32)
    b1 = params["b1"].reshape(-1, 1).astype(jnp.float32)
    b2 = params["b2"].reshape(-1, 1).astype(jnp.float32)
    b3 = params["b3"].reshape(-1, 1).astype(jnp.float32)
    bo = params["bo"].reshape(-1, 1).astype(jnp.float32)

    h = _gcn_layer(xT_bf, adj_bf, w1T, b1, tn=tn, tk=tk)          # layer 1
    h = _gcn_layer(h, adj_bf, w2T, b2, tn=tn, tk=tk)              # layer 2
    logits_t, probs_t = _gcn_last_layer_head(                     # layer 3 + head
        h, adj_bf, w3T, b3, woT, bo, tn=tn, tk=tk)
    embeds = _embeds(pool_pad, x_pad, tk=tk)                      # avg_pool(batch.y)
    return dict(logits=logits_t.T[:n], probs=probs_t.T[:n], embeds=embeds)


def gcn_classifier_nc(graph, x, params, pool):
    if graph["mode"] == "fused":
        return _forward_fused(graph["adj"], x, params, pool)
    return _forward_tiled(graph["adj"], x, params, pool)


# ---------------------------------------------------------------------------
# Glue / reference / demo.
# ---------------------------------------------------------------------------
def build_normalized_adjacency(src, dst, edge_weight, num_nodes):
    """Dense GCN normalization (add_self_loops=True): D^-1/2 (A + I) D^-1/2."""
    a = jnp.zeros((num_nodes, num_nodes), jnp.float32).at[dst, src].add(edge_weight)
    a = a + jnp.eye(num_nodes, dtype=jnp.float32)
    deg = a.sum(axis=1)
    dinv = jnp.where(deg > 0, 1.0 / jnp.sqrt(deg), 0.0)
    return dinv[:, None] * a * dinv[None, :]


def glorot(key, shape):
    fan_in, fan_out = shape
    lim = (6.0 / (fan_in + fan_out)) ** 0.5
    return jax.random.uniform(key, shape, jnp.float32, -lim, lim)


def reference_forward(adj_hat, x, params, pool):
    h = _leaky(adj_hat @ (x @ params["w1"]) + params["b1"][None, :])
    h = _leaky(adj_hat @ (h @ params["w2"]) + params["b2"][None, :])
    h = adj_hat @ (h @ params["w3"]) + params["b3"][None, :]
    logits = h @ params["wo"] + params["bo"][None, :]
    probs = jax.nn.softmax(logits, axis=-1)
    embeds = pool @ x
    return logits, probs, embeds


def _make_case(key, n, f, c):
    ks = jax.random.split(key, 10)
    x = jax.random.normal(ks[0], (n, f), jnp.float32)
    y = jax.random.randint(ks[1], (n,), 0, c)
    base = jnp.arange(n)
    srcs = jnp.concatenate([base, (base + 1) % n, base, (base + 5) % n])
    dsts = jnp.concatenate([(base + 1) % n, base, (base + 5) % n, base])
    ew = jnp.ones(srcs.shape[0], jnp.float32)
    adj_hat = build_normalized_adjacency(srcs, dsts, ew, n)
    # Pooling matrix for avg_pool(batch.y, batch): row c averages nodes with y==c.
    # TODO(synk): pyg.avg_pool relabels clusters to consecutive ids; here embeds keeps a
    # fixed (num_classes, F) layout (empty clusters -> zero rows).
    onehot = jax.nn.one_hot(y, c, dtype=jnp.float32)              # (N, C)
    counts = onehot.sum(axis=0)
    pool = (onehot / jnp.maximum(counts, 1.0)[None, :]).T         # (C, N)
    return adj_hat, x, pool


def _check(out, adj_hat, x, params, pool, n, c, f, *, tol_l, tol_p):
    ref_logits, ref_probs, ref_embeds = reference_forward(adj_hat, x, params, pool)
    assert out["logits"].shape == (n, c)
    assert out["probs"].shape == (n, c)
    assert out["embeds"].shape == (c, f)
    assert bool(jnp.all(jnp.isfinite(out["logits"])))
    assert bool(jnp.allclose(out["logits"], ref_logits, atol=tol_l, rtol=tol_l))
    assert bool(jnp.allclose(out["probs"], ref_probs, atol=tol_p))
    assert bool(jnp.allclose(out["probs"].sum(axis=-1), 1.0, atol=1e-3))
    assert bool(jnp.allclose(out["embeds"], ref_embeds, atol=2e-3, rtol=2e-3))


if __name__ == "__main__":
    key = jax.random.PRNGKey(0)
    F, H, C = 16, 32, 4   # node_features, hidden_channels, num_classes
    kp, k1, k2 = jax.random.split(key, 3)
    ks = jax.random.split(kp, 8)

    # Parameters stored as (in, out) = torch weight transposed; biases 1-D.
    params = dict(
        w1=glorot(ks[0], (F, H)), b1=0.1 * jax.random.normal(ks[1], (H,), jnp.float32),
        w2=glorot(ks[2], (H, H)), b2=0.1 * jax.random.normal(ks[3], (H,), jnp.float32),
        w3=glorot(ks[4], (H, H)), b3=0.1 * jax.random.normal(ks[5], (H,), jnp.float32),
        wo=glorot(ks[6], (H, C)), bo=0.1 * jax.random.normal(ks[7], (C,), jnp.float32),
    )
    # self.lin (hidden*2 -> hidden) exists in __init__ but is never used in forward.

    # --- Case 1: small graph -> fused VMEM-resident path (demo scale). ---
    N1 = 64
    adj1, x1, pool1 = _make_case(k1, N1, F, C)
    g1 = prepare_graph(adj1, N1)               # once-per-graph pad (f32, fused path)
    out1 = gcn_classifier_nc(g1, x1, params, pool1)
    jax.block_until_ready(out1)
    _check(out1, adj1, x1, params, pool1, N1, C, F, tol_l=5e-2, tol_p=2e-2)

    # --- Case 2: larger graph -> tiled streaming path (bf16 adjacency). ---
    N2 = 1500
    adj2, x2, pool2 = _make_case(k2, N2, F, C)
    g2 = prepare_graph(adj2, N2)               # once-per-graph pad+bf16 cast
    out2 = gcn_classifier_nc(g2, x2, params, pool2)
    jax.block_until_ready(out2)
    _check(out2, adj2, x2, params, pool2, N2, C, F, tol_l=1e-1, tol_p=5e-2)

    print("KERNEL_OK")
</pallas_src>

<mosaic_0001>
module attributes {stable_mosaic.version = 11 : i64} {
  func.func @_fused_kernel(%arg0: memref<128x128xf32, #tpu.memory_space<vmem>>, %arg1: memref<16x128xf32, #tpu.memory_space<vmem>>, %arg2: memref<128x4xf32, #tpu.memory_space<vmem>>, %arg3: memref<32x16xf32, #tpu.memory_space<vmem>>, %arg4: memref<32x1xf32, #tpu.memory_space<vmem>>, %arg5: memref<32x32xf32, #tpu.memory_space<vmem>>, %arg6: memref<32x1xf32, #tpu.memory_space<vmem>>, %arg7: memref<32x32xf32, #tpu.memory_space<vmem>>, %arg8: memref<32x1xf32, #tpu.memory_space<vmem>>, %arg9: memref<4x32xf32, #tpu.memory_space<vmem>>, %arg10: memref<4x1xf32, #tpu.memory_space<vmem>>, %arg11: memref<4x128xf32, #tpu.memory_space<vmem>>, %arg12: memref<4x128xf32, #tpu.memory_space<vmem>>, %arg13: memref<16x4xf32, #tpu.memory_space<vmem>>) attributes {dimension_semantics = [], scalar_prefetch = 0 : i64, scratch_operands = 0 : i64, tpu.core_type = #tpu.core_type<tc>} {
    %c0 = arith.constant 0 : index
    %c0_0 = arith.constant 0 : index
    %0 = vector.load %arg0[%c0, %c0_0] : memref<128x128xf32, #tpu.memory_space<vmem>>, vector<128x128xf32>
    %c0_1 = arith.constant 0 : index
    %c0_2 = arith.constant 0 : index
    %1 = vector.load %arg1[%c0_1, %c0_2] : memref<16x128xf32, #tpu.memory_space<vmem>>, vector<16x128xf32>
    %c0_3 = arith.constant 0 : index
    %c0_4 = arith.constant 0 : index
    %2 = vector.load %arg3[%c0_3, %c0_4] : memref<32x16xf32, #tpu.memory_space<vmem>>, vector<32x16xf32>
    %cst = arith.constant dense<0.000000e+00> : vector<16x128xf32>
    %3 = tpu.matmul %1, %0, %cst {dimension_numbers = #tpu.dot_dimension_numbers<[1], [0], [0], [1], [0, 0, 1, 1], [], []>} : vector<16x128xf32>, vector<128x128xf32>, vector<16x128xf32> -> vector<16x128xf32>
    %cst_5 = arith.constant dense<0.000000e+00> : vector<32x128xf32>
    %4 = tpu.matmul %2, %3, %cst_5 {dimension_numbers = #tpu.dot_dimension_numbers<[1], [0], [0], [1], [0, 0, 1, 1], [], []>} : vector<32x16xf32>, vector<16x128xf32>, vector<32x128xf32> -> vector<32x128xf32>
    %c0_6 = arith.constant 0 : index
    %c0_7 = arith.constant 0 : index
    %5 = vector.load %arg4[%c0_6, %c0_7] : memref<32x1xf32, #tpu.memory_space<vmem>>, vector<32x1xf32>
    %6 = vector.broadcast %5 : vector<32x1xf32> to vector<32x128xf32>
    %7 = arith.addf %4, %6 : vector<32x128xf32>
    %cst_8 = arith.constant 0.000000e+00 : f32
    %8 = vector.broadcast %cst_8 : f32 to vector<32x128xf32>
    %9 = arith.cmpf oge, %7, %8 : vector<32x128xf32>
    %cst_9 = arith.constant 0.00999999977 : f32
    %10 = vector.broadcast %cst_9 : f32 to vector<32x128xf32>
    %11 = arith.mulf %10, %7 : vector<32x128xf32>
    %12 = arith.select %9, %7, %11 : vector<32x128xi1>, vector<32x128xf32>
    %c0_10 = arith.constant 0 : index
    %c0_11 = arith.constant 0 : index
    %13 = vector.load %arg5[%c0_10, %c0_11] : memref<32x32xf32, #tpu.memory_space<vmem>>, vector<32x32xf32>
    %cst_12 = arith.constant dense<0.000000e+00> : vector<32x128xf32>
    %14 = tpu.matmul %12, %0, %cst_12 {dimension_numbers = #tpu.dot_dimension_numbers<[1], [0], [0], [1], [0, 0, 1, 1], [], []>} : vector<32x128xf32>, vector<128x128xf32>, vector<32x128xf32> -> vector<32x128xf32>
    %cst_13 = arith.constant dense<0.000000e+00> : vector<32x128xf32>
    %15 = tpu.matmul %13, %14, %cst_13 {dimension_numbers = #tpu.dot_dimension_numbers<[1], [0], [0], [1], [0, 0, 1, 1], [], []>} : vector<32x32xf32>, vector<32x128xf32>, vector<32x128xf32> -> vector<32x128xf32>
    %c0_14 = arith.constant 0 : index
    %c0_15 = arith.constant 0 : index
    %16 = vector.load %arg6[%c0_14, %c0_15] : memref<32x1xf32, #tpu.memory_space<vmem>>, vector<32x1xf32>
    %17 = vector.broadcast %16 : vector<32x1xf32> to vector<32x128xf32>
    %18 = arith.addf %15, %17 : vector<32x128xf32>
    %cst_16 = arith.constant 0.000000e+00 : f32
    %19 = vector.broadcast %cst_16 : f32 to vector<32x128xf32>
    %20 = arith.cmpf oge, %18, %19 : vector<32x128xf32>
    %cst_17 = arith.constant 0.00999999977 : f32
    %21 = vector.broadcast %cst_17 : f32 to vector<32x128xf32>
    %22 = arith.mulf %21, %18 : vector<32x128xf32>
    %23 = arith.select %20, %18, %22 : vector<32x128xi1>, vector<32x128xf32>
    %c0_18 = arith.constant 0 : index
    %c0_19 = arith.constant 0 : index
    %24 = vector.load %arg7[%c0_18, %c0_19] : memref<32x32xf32, #tpu.memory_space<vmem>>, vector<32x32xf32>
    %cst_20 = arith.constant dense<0.000000e+00> : vector<32x128xf32>
    %25 = tpu.matmul %23, %0, %cst_20 {dimension_numbers = #tpu.dot_dimension_numbers<[1], [0], [0], [1], [0, 0, 1, 1], [], []>} : vector<32x128xf32>, vector<128x128xf32>, vector<32x128xf32> -> vector<32x128xf32>
    %cst_21 = arith.constant dense<0.000000e+00> : vector<32x128xf32>
    %26 = tpu.matmul %24, %25, %cst_21 {dimension_numbers = #tpu.dot_dimension_numbers<[1], [0], [0], [1], [0, 0, 1, 1], [], []>} : vector<32x32xf32>, vector<32x128xf32>, vector<32x128xf32> -> vector<32x128xf32>
    %c0_22 = arith.constant 0 : index
    %c0_23 = arith.constant 0 : index
    %27 = vector.load %arg8[%c0_22, %c0_23] : memref<32x1xf32, #tpu.memory_space<vmem>>, vector<32x1xf32>
    %28 = vector.broadcast %27 : vector<32x1xf32> to vector<32x128xf32>
    %29 = arith.addf %26, %28 : vector<32x128xf32>
    %c0_24 = arith.constant 0 : index
    %c0_25 = arith.constant 0 : index
    %30 = vector.load %arg9[%c0_24, %c0_25] : memref<4x32xf32, #tpu.memory_space<vmem>>, vector<4x32xf32>
    %cst_26 = arith.constant dense<0.000000e+00> : vector<4x128xf32>
    %31 = tpu.matmul %30, %29, %cst_26 {dimension_numbers = #tpu.dot_dimension_numbers<[1], [0], [0], [1], [0, 0, 1, 1], [], []>} : vector<4x32xf32>, vector<32x128xf32>, vector<4x128xf32> -> vector<4x128xf32>
    %c0_27 = arith.constant 0 : index
    %c0_28 = arith.constant 0 : index
    %32 = vector.load %arg10[%c0_27, %c0_28] : memref<4x1xf32, #tpu.memory_space<vmem>>, vector<4x1xf32>
    %33 = vector.broadcast %32 : vector<4x1xf32> to vector<4x128xf32>
    %34 = arith.addf %31, %33 : vector<4x128xf32>
    %c0_29 = arith.constant 0 : index
    %c0_30 = arith.constant 0 : index
    %35 = vector.load %arg11[%c0_29, %c0_30] : memref<4x128xf32, #tpu.memory_space<vmem>>, vector<4x128xf32>
    tpu.vector_store %arg11[%c0_29, %c0_30], %34 {strides = array<i32>} : memref<4x128xf32, #tpu.memory_space<vmem>>, vector<4x128xf32>,
    %cst_31 = arith.constant dense<0xFF800000> : vector<128xf32>
    %36 = vector.multi_reduction <maximumf>, %34, %cst_31 [0] : vector<4x128xf32> to vector<128xf32>
    %37 = vector.shape_cast %36 : vector<128xf32> to vector<1x128xf32>
    %38 = vector.broadcast %37 : vector<1x128xf32> to vector<4x128xf32>
    %39 = arith.subf %34, %38 : vector<4x128xf32>
    %40 = math.exp %39 : vector<4x128xf32>
    %cst_32 = arith.constant dense<0.000000e+00> : vector<128xf32>
    %41 = vector.multi_reduction <add>, %40, %cst_32 [0] : vector<4x128xf32> to vector<128xf32>
    %42 = vector.shape_cast %41 : vector<128xf32> to vector<1x128xf32>
    %43 = vector.broadcast %42 : vector<1x128xf32> to vector<4x128xf32>
    %44 = arith.divf %40, %43 : vector<4x128xf32>
    %c0_33 = arith.constant 0 : index
    %c0_34 = arith.constant 0 : index
    %45 = vector.load %arg12[%c0_33, %c0_34] : memref<4x128xf32, #tpu.memory_space<vmem>>, vector<4x128xf32>
    tpu.vector_store %arg12[%c0_33, %c0_34], %44 {strides = array<i32>} : memref<4x128xf32, #tpu.memory_space<vmem>>, vector<4x128xf32>,
    %c0_35 = arith.constant 0 : index
    %c0_36 = arith.constant 0 : index
    %46 = vector.load %arg2[%c0_35, %c0_36] : memref<128x4xf32, #tpu.memory_space<vmem>>, vector<128x4xf32>
    %cst_37 = arith.constant dense<0.000000e+00> : vector<16x4xf32>
    %47 = tpu.matmul %1, %46, %cst_37 {dimension_numbers = #tpu.dot_dimension_numbers<[1], [0], [0], [1], [0, 0, 1, 1], [], []>} : vector<16x128xf32>, vector<128x4xf32>, vector<16x4xf32> -> vector<16x4xf32>
    %c0_38 = arith.constant 0 : index
    %c0_39 = arith.constant 0 : index
    %48 = vector.load %arg13[%c0_38, %c0_39] : memref<16x4xf32, #tpu.memory_space<vmem>>, vector<16x4xf32>
    tpu.vector_store %arg13[%c0_38, %c0_39], %47 {strides = array<i32>} : memref<16x4xf32, #tpu.memory_space<vmem>>, vector<16x4xf32>,
    return
  }
}

</mosaic_0001>

<llo_original>
// kernel: _forward_fused.1
$region0: #{_forward_fused.1}
  #allocation0 [shape = 'u32[]', space=smem, size = 0x4, offset = 0x4, fixed_abs, tag = 'smem constant byte address 0x4 - core index']
  #allocation1 [shape = 'u32[72,128]{1,0:T(1,128)}', space=vmem, size = 0x9000, scoped, tag = 'internal scratch']
  %s0 = inlined_call_operand.vmem [shape: f32[128,128], index: 0, kind: input, shape index: {}]
  %s1 = inlined_call_operand.vmem [shape: f32[16,128], index: 1, kind: input, shape index: {}]
  %s2 = inlined_call_operand.vmem [shape: f32[128,4], index: 2, kind: input, shape index: {}]
  %s3 = inlined_call_operand.vmem [shape: f32[32,16], index: 3, kind: input, shape index: {}]
  %s4 = inlined_call_operand.vmem [shape: f32[32,1], index: 4, kind: input, shape index: {}]
  %s5 = inlined_call_operand.vmem [shape: f32[32,32], index: 5, kind: input, shape index: {}]
  %s6 = inlined_call_operand.vmem [shape: f32[32,1], index: 6, kind: input, shape index: {}]
  %s7 = inlined_call_operand.vmem [shape: f32[32,32], index: 7, kind: input, shape index: {}]
  %s8 = inlined_call_operand.vmem [shape: f32[32,1], index: 8, kind: input, shape index: {}]
  %s9 = inlined_call_operand.vmem [shape: f32[4,32], index: 9, kind: input, shape index: {}]
  %s10 = inlined_call_operand.vmem [shape: f32[4,1], index: 10, kind: input, shape index: {}]
  %s11 = inlined_call_operand.hbm [shape: f32[4,128], index: 11, kind: output, shape index: {0}]
  %s12 = inlined_call_operand.hbm [shape: f32[4,128], index: 12, kind: output, shape index: {1}]
  %s13 = inlined_call_operand.vmem [shape: f32[16,4], index: 13, kind: output, shape index: {2}]
  %14 = xla_tuple %s11, %s12, %s13
  %s15 = sld [smem:[#allocation0]]
  $region70: #{_forward_fused.1} parent=0
    _
  %s17 = ssub.s32 1, %s15
  %s18 = scalar_select 0, %s17, %s15
  $region1: #{_forward_fused.1} parent=0
    #allocation2 [shape = 'u8[2048]{0}', space=vmem, size = 0x800, scoped, tag = 'output window, operand 0, single buffered']
    #allocation3 [shape = 's32[1]{0}', space=sflag, size = 0x4, scoped, tag = 'scoped memory for _forward_fused.1']
    #allocation4 [shape = 'u8[2048]{0}', space=vmem, size = 0x800, scoped, tag = 'output window, operand 1, single buffered']
    #allocation5 [shape = 's32[1]{0}', space=sflag, size = 0x4, scoped, tag = 'scoped memory for _forward_fused.1']
    %19 = vsyncpa [#allocation3], 0
    %20 = vsyncpa [#allocation5], 0
    // Predicated region
    $region2: #{_forward_fused.1} parent=1 // pred_check
      _
    $region3: #{_forward_fused.1} parent=1 // pred_check_branch
      %22 = sbr.rel (0) target = $region5
    $region4: #{_forward_fused.1} parent=1 // pred_region
      _
    $region5: #{_forward_fused.1} parent=1 // pred_fallthru
      _
    // Predicated region
    $region6: #{_forward_fused.1} parent=1 // pred_check
      _
    $region7: #{_forward_fused.1} parent=1 // pred_check_branch
      %24 = sbr.rel (0) target = $region9
    $region8: #{_forward_fused.1} parent=1 // pred_region
      _
    $region9: #{_forward_fused.1} parent=1 // pred_fallthru
      _
    // Predicated region
    $region10: #{_forward_fused.1} parent=1 // pred_check
      _
    $region11: #{_forward_fused.1} parent=1 // pred_check_branch
      %26 = sbr.rel (0) target = $region13
    $region12: #{_forward_fused.1} parent=1 // pred_region
      _
    $region13: #{_forward_fused.1} parent=1 // pred_fallthru
      _
    // Predicated region
    $region14: #{_forward_fused.1} parent=1 // pred_check
      _
    $region15: #{_forward_fused.1} parent=1 // pred_check_branch
      %28 = sbr.rel (0) target = $region17
    $region16: #{_forward_fused.1} parent=1 // pred_region
      _
    $region17: #{_forward_fused.1} parent=1 // pred_fallthru
      _
    // Predicated region
    $region18: #{_forward_fused.1} parent=1 // pred_check
      _
    $region19: #{_forward_fused.1} parent=1 // pred_check_branch
      %30 = sbr.rel (0) target = $region21
    $region20: #{_forward_fused.1} parent=1 // pred_region
      _
    $region21: #{_forward_fused.1} parent=1 // pred_fallthru
      _
    // Predicated region
    $region22: #{_forward_fused.1} parent=1 // pred_check
      _
    $region23: #{_forward_fused.1} parent=1 // pred_check_branch
      %32 = sbr.rel (0) target = $region25
    $region24: #{_forward_fused.1} parent=1 // pred_region
      _
    $region25: #{_forward_fused.1} parent=1 // pred_fallthru
      _
    // Predicated region
    $region26: #{_forward_fused.1} parent=1 // pred_check
      _
    $region27: #{_forward_fused.1} parent=1 // pred_check_branch
      %34 = sbr.rel (0) target = $region29
    $region28: #{_forward_fused.1} parent=1 // pred_region
      _
    $region29: #{_forward_fused.1} parent=1 // pred_fallthru
      _
    // Predicated region
    $region30: #{_forward_fused.1} parent=1 // pred_check
      _
    $region31: #{_forward_fused.1} parent=1 // pred_check_branch
      %36 = sbr.rel (0) target = $region33
    $region32: #{_forward_fused.1} parent=1 // pred_region
      _
    $region33: #{_forward_fused.1} parent=1 // pred_fallthru
      _
    // Predicated region
    $region34: #{_forward_fused.1} parent=1 // pred_check
      _
    $region35: #{_forward_fused.1} parent=1 // pred_check_branch
      %38 = sbr.rel (0) target = $region37
    $region36: #{_forward_fused.1} parent=1 // pred_region
      _
    $region37: #{_forward_fused.1} parent=1 // pred_fallthru
      _
    // Predicated region
    $region38: #{_forward_fused.1} parent=1 // pred_check
      _
    $region39: #{_forward_fused.1} parent=1 // pred_check_branch
      %40 = sbr.rel (0) target = $region41
    $region40: #{_forward_fused.1} parent=1 // pred_region
      _
    $region41: #{_forward_fused.1} parent=1 // pred_fallthru
      _
    // Predicated region
    $region42: #{_forward_fused.1} parent=1 // pred_check
      _
    $region43: #{_forward_fused.1} parent=1 // pred_check_branch
      %42 = sbr.rel (0) target = $region45
    $region44: #{_forward_fused.1} parent=1 // pred_region
      _
    $region45: #{_forward_fused.1} parent=1 // pred_fallthru
      _
    %v43 = vld [vmem:[%s0] sm:$0xff]
    %v44 = vld [vmem:[%s0 + $0x8] sm:$0xff]
    %v45 = vld [vmem:[%s0 + $0x10] sm:$0xff]
    %v46 = vld [vmem:[%s0 + $0x18] sm:$0xff]
    %v47 = vld [vmem:[%s0 + $0x20] sm:$0xff]
    %v48 = vld [vmem:[%s0 + $0x28] sm:$0xff]
    %v49 = vld [vmem:[%s0 + $0x30] sm:$0xff]
    %v50 = vld [vmem:[%s0 + $0x38] sm:$0xff]
    %v51 = vld [vmem:[%s0 + $0x40] sm:$0xff]
    %v52 = vld [vmem:[%s0 + $0x48] sm:$0xff]
    %v53 = vld [vmem:[%s0 + $0x50] sm:$0xff]
    %v54 = vld [vmem:[%s0 + $0x58] sm:$0xff]
    %v55 = vld [vmem:[%s0 + $0x60] sm:$0xff]
    %v56 = vld [vmem:[%s0 + $0x68] sm:$0xff]
    %v57 = vld [vmem:[%s0 + $0x70] sm:$0xff]
    %v58 = vld [vmem:[%s0 + $0x78] sm:$0xff]
    %v59 = vld [vmem:[%s1] sm:$0xff]
    %v60 = vld [vmem:[%s1 + $0x8] sm:$0xff]
    %v61 = vld [vmem:[%s3] sm:$0xff]
    %v62 = vld [vmem:[%s3 + $0x8] sm:$0xff]
    %v63 = vld [vmem:[%s3 + $0x10] sm:$0xff]
    %v64 = vld [vmem:[%s3 + $0x18] sm:$0xff]
    %65 = vmatpush.msra.mxu0 %v58
    %66 = vmatpush.msra.mxu0 %v57
    %67 = vmatpush.msra.mxu0 %v56
    %68 = vmatpush.msra.mxu0 %v55
    %69 = vmatpush.msra.mxu0 %v54
    %70 = vmatpush.msra.mxu0 %v53
    %71 = vmatpush.msra.mxu0 %v52
    %72 = vmatpush.msra.mxu0 %v51
    %73 = vmatpush.msra.mxu0 %v50
    %74 = vmatpush.msra.mxu0 %v49
    %75 = vmatpush.msra.mxu0 %v48
    %76 = vmatpush.msra.mxu0 %v47
    %77 = vmatpush.msra.mxu0 %v46
    %78 = vmatpush.msra.mxu0 %v45
    %79 = vmatpush.msra.mxu0 %v44
    %80 = vmatpush.msra.mxu0 %v43
    %81 = vmatmul.f32.gmra.mxu0 %v59
    %v82 = vpop.f32.mrf.mxu0
    %v83 = vadd.f32 0.0, %v82
    %84 = vmatmul.f32.gmra.mxu0 %v60
    %v85 = vpop.f32.mrf.mxu0
    %v86 = vadd.f32 0.0, %v85
    %87 = vdwg.mxu0
    %v88 = vld [vmem:[%s4] sm:$0xff]
    %v89 = vld [vmem:[%s4 + $0x8] sm:$0xff]
    %v90 = vld [vmem:[%s4 + $0x10] sm:$0xff]
    %v91 = vld [vmem:[%s4 + $0x18] sm:$0xff]
    %93 = vset.pattern.permute.xlu0 0
    %94 = vperm.xlu0 %93, %v88
    %v95 = vpop.permute.xlu0 %94
    %98 = vset.pattern.permute.xlu0 0
    %99 = vperm.xlu0 %98, %v89
    %v100 = vpop.permute.xlu0 %99
    %103 = vset.pattern.permute.xlu0 0
    %104 = vperm.xlu0 %103, %v90
    %v105 = vpop.permute.xlu0 %104
    %108 = vset.pattern.permute.xlu0 0
    %109 = vperm.xlu0 %108, %v91
    %v110 = vpop.permute.xlu0 %109
    %vm112 = vcmask 130048
    %v114 = vsel %vm112, %v61, 0
    %v117 = vsel %vm112, %v62, 0
    %v120 = vsel %vm112, %v63, 0
    %v123 = vsel %vm112, %v64, 0
    %125 = vmatpush.msra.mxu0 0.0
    %126 = vmatpush.msra.mxu0 0.0
    %127 = vmatpush.msra.mxu0 0.0
    %128 = vmatpush.msra.mxu0 0.0
    %129 = vmatpush.msra.mxu0 0.0
    %130 = vmatpush.msra.mxu0 0.0
    %131 = vmatpush.msra.mxu0 0.0
    %132 = vmatpush.msra.mxu0 0.0
    %133 = vmatpush.msra.mxu0 0.0
    %134 = vmatpush.msra.mxu0 0.0
    %135 = vmatpush.msra.mxu0 0.0
    %136 = vmatpush.msra.mxu0 0.0
    %137 = vmatpush.msra.mxu0 0.0
    %138 = vmatpush.msra.mxu0 0.0
    %139 = vmatpush.msra.mxu0 %v86
    %140 = vmatpush.msra.mxu0 %v83
    %141 = vmatmul.f32.gmra.mxu0 %v114
    %v142 = vpop.f32.mrf.mxu0
    %v143 = vadd.f32 %v95, %v142
    %144 = vmatmul.f32.gmra.mxu0 %v117
    %v145 = vpop.f32.mrf.mxu0
    %v146 = vadd.f32 %v100, %v145
    %147 = vmatmul.f32.gmra.mxu0 %v120
    %v148 = vpop.f32.mrf.mxu0
    %v149 = vadd.f32 %v105, %v148
    %150 = vmatmul.f32.gmra.mxu0 %v123
    %v151 = vpop.f32.mrf.mxu0
    %v152 = vadd.f32 %v110, %v151
    %153 = vdwg.mxu0
    %vm154 = vcmp.ge.f32.partialorder %v143, 0.0
    %vm155 = vcmp.ge.f32.partialorder %v146, 0.0
    %vm156 = vcmp.ge.f32.partialorder %v149, 0.0
    %vm157 = vcmp.ge.f32.partialorder %v152, 0.0
    %v158 = vmul.f32 %v143, 0.01
    %v159 = vmul.f32 %v146, 0.01
    %v160 = vmul.f32 %v149, 0.01
    %v161 = vmul.f32 %v152, 0.01
    %v162 = vsel %vm154, %v143, %v158
    %v163 = vsel %vm155, %v146, %v159
    %v164 = vsel %vm156, %v149, %v160
    %v165 = vsel %vm157, %v152, %v161
    %v166 = vld [vmem:[%s5] sm:$0xff]
    %v167 = vld [vmem:[%s5 + $0x8] sm:$0xff]
    %v168 = vld [vmem:[%s5 + $0x10] sm:$0xff]
    %v169 = vld [vmem:[%s5 + $0x18] sm:$0xff]
    %170 = vmatpush.msra.mxu0 %v58
    %171 = vmatpush.msra.mxu0 %v57
    %172 = vmatpush.msra.mxu0 %v56
    %173 = vmatpush.msra.mxu0 %v55
    %174 = vmatpush.msra.mxu0 %v54
    %175 = vmatpush.msra.mxu0 %v53
    %176 = vmatpush.msra.mxu0 %v52
    %177 = vmatpush.msra.mxu0 %v51
    %178 = vmatpush.msra.mxu0 %v50
    %179 = vmatpush.msra.mxu0 %v49
    %180 = vmatpush.msra.mxu0 %v48
    %181 = vmatpush.msra.mxu0 %v47
    %182 = vmatpush.msra.mxu0 %v46
    %183 = vmatpush.msra.mxu0 %v45
    %184 = vmatpush.msra.mxu0 %v44
    %185 = vmatpush.msra.mxu0 %v43
    %186 = vmatmul.f32.gmra.mxu0 %v162
    %v187 = vpop.f32.mrf.mxu0
    %v188 = vadd.f32 0.0, %v187
    %189 = vmatmul.f32.gmra.mxu0 %v163
    %v190 = vpop.f32.mrf.mxu0
    %v191 = vadd.f32 0.0, %v190
    %192 = vmatmul.f32.gmra.mxu0 %v164
    %v193 = vpop.f32.mrf.mxu0
    %v194 = vadd.f32 0.0, %v193
    %195 = vmatmul.f32.gmra.mxu0 %v165
    %v196 = vpop.f32.mrf.mxu0
    %v197 = vadd.f32 0.0, %v196
    %198 = vdwg.mxu0
    %v199 = vld [vmem:[%s6] sm:$0xff]
    %v200 = vld [vmem:[%s6 + $0x8] sm:$0xff]
    %v201 = vld [vmem:[%s6 + $0x10] sm:$0xff]
    %v202 = vld [vmem:[%s6 + $0x18] sm:$0xff]
    %204 = vset.pattern.permute.xlu0 0
    %205 = vperm.xlu0 %204, %v199
    %v206 = vpop.permute.xlu0 %205
    %209 = vset.pattern.permute.xlu0 0
    %210 = vperm.xlu0 %209, %v200
    %v211 = vpop.permute.xlu0 %210
    %214 = vset.pattern.permute.xlu0 0
    %215 = vperm.xlu0 %214, %v201
    %v216 = vpop.permute.xlu0 %215
    %219 = vset.pattern.permute.xlu0 0
    %220 = vperm.xlu0 %219, %v202
    %v221 = vpop.permute.xlu0 %220
    %vm223 = vcmask 261120
    %v225 = vsel %vm223, %v166, 0
    %v228 = vsel %vm223, %v167, 0
    %v231 = vsel %vm223, %v168, 0
    %v234 = vsel %vm223, %v169, 0
    %236 = vmatpush.msra.mxu0 0.0
    %237 = vmatpush.msra.mxu0 0.0
    %238 = vmatpush.msra.mxu0 0.0
    %239 = vmatpush.msra.mxu0 0.0
    %240 = vmatpush.msra.mxu0 0.0
    %241 = vmatpush.msra.mxu0 0.0
    %242 = vmatpush.msra.mxu0 0.0
    %243 = vmatpush.msra.mxu0 0.0
    %244 = vmatpush.msra.mxu0 0.0
    %245 = vmatpush.msra.mxu0 0.0
    %246 = vmatpush.msra.mxu0 0.0
    %247 = vmatpush.msra.mxu0 0.0
    %248 = vmatpush.msra.mxu0 %v197
    %249 = vmatpush.msra.mxu0 %v194
    %250 = vmatpush.msra.mxu0 %v191
    %251 = vmatpush.msra.mxu0 %v188
    %252 = vmatmul.f32.gmra.mxu0 %v225
    %v253 = vpop.f32.mrf.mxu0
    %v254 = vadd.f32 %v206, %v253
    %255 = vmatmul.f32.gmra.mxu0 %v228
    %v256 = vpop.f32.mrf.mxu0
    %v257 = vadd.f32 %v211, %v256
    %258 = vmatmul.f32.gmra.mxu0 %v231
    %v259 = vpop.f32.mrf.mxu0
    %v260 = vadd.f32 %v216, %v259
    %261 = vmatmul.f32.gmra.mxu0 %v234
    %v262 = vpop.f32.mrf.mxu0
    %v263 = vadd.f32 %v221, %v262
    %264 = vdwg.mxu0
    %vm265 = vcmp.ge.f32.partialorder %v254, 0.0
    %vm266 = vcmp.ge.f32.partialorder %v257, 0.0
    %vm267 = vcmp.ge.f32.partialorder %v260, 0.0
    %vm268 = vcmp.ge.f32.partialorder %v263, 0.0
    %v269 = vmul.f32 %v254, 0.01
    %v270 = vmul.f32 %v257, 0.01
    %v271 = vmul.f32 %v260, 0.01
    %v272 = vmul.f32 %v263, 0.01
    %v273 = vsel %vm265, %v254, %v269
    %v274 = vsel %vm266, %v257, %v270
    %v275 = vsel %vm267, %v260, %v271
    %v276 = vsel %vm268, %v263, %v272
    %v277 = vld [vmem:[%s7] sm:$0xff]
    %v278 = vld [vmem:[%s7 + $0x8] sm:$0xff]
    %v279 = vld [vmem:[%s7 + $0x10] sm:$0xff]
    %v280 = vld [vmem:[%s7 + $0x18] sm:$0xff]
    %281 = vmatpush.msra.mxu0 %v58
    %282 = vmatpush.msra.mxu0 %v57
    %283 = vmatpush.msra.mxu0 %v56
    %284 = vmatpush.msra.mxu0 %v55
    %285 = vmatpush.msra.mxu0 %v54
    %286 = vmatpush.msra.mxu0 %v53
    %287 = vmatpush.msra.mxu0 %v52
    %288 = vmatpush.msra.mxu0 %v51
    %289 = vmatpush.msra.mxu0 %v50
    %290 = vmatpush.msra.mxu0 %v49
    %291 = vmatpush.msra.mxu0 %v48
    %292 = vmatpush.msra.mxu0 %v47
    %293 = vmatpush.msra.mxu0 %v46
    %294 = vmatpush.msra.mxu0 %v45
    %295 = vmatpush.msra.mxu0 %v44
    %296 = vmatpush.msra.mxu0 %v43
    %297 = vmatmul.f32.gmra.mxu0 %v273
    %v298 = vpop.f32.mrf.mxu0
    %v299 = vadd.f32 0.0, %v298
    %300 = vmatmul.f32.gmra.mxu0 %v274
    %v301 = vpop.f32.mrf.mxu0
    %v302 = vadd.f32 0.0, %v301
    %303 = vmatmul.f32.gmra.mxu0 %v275
    %v304 = vpop.f32.mrf.mxu0
    %v305 = vadd.f32 0.0, %v304
    %306 = vmatmul.f32.gmra.mxu0 %v276
    %v307 = vpop.f32.mrf.mxu0
    %v308 = vadd.f32 0.0, %v307
    %309 = vdwg.mxu0
    %v310 = vld [vmem:[%s8] sm:$0xff]
    %v311 = vld [vmem:[%s8 + $0x8] sm:$0xff]
    %v312 = vld [vmem:[%s8 + $0x10] sm:$0xff]
    %v313 = vld [vmem:[%s8 + $0x18] sm:$0xff]
    %315 = vset.pattern.permute.xlu0 0
    %316 = vperm.xlu0 %315, %v310
    %v317 = vpop.permute.xlu0 %316
    %320 = vset.pattern.permute.xlu0 0
    %321 = vperm.xlu0 %320, %v311
    %v322 = vpop.permute.xlu0 %321
    %325 = vset.pattern.permute.xlu0 0
    %326 = vperm.xlu0 %325, %v312
    %v327 = vpop.permute.xlu0 %326
    %330 = vset.pattern.permute.xlu0 0
    %331 = vperm.xlu0 %330, %v313
    %v332 = vpop.permute.xlu0 %331
    %v335 = vsel %vm223, %v277, 0
    %v338 = vsel %vm223, %v278, 0
    %v341 = vsel %vm223, %v279, 0
    %v344 = vsel %vm223, %v280, 0
    %346 = vmatpush.msra.mxu0 0.0
    %347 = vmatpush.msra.mxu0 0.0
    %348 = vmatpush.msra.mxu0 0.0
    %349 = vmatpush.msra.mxu0 0.0
    %350 = vmatpush.msra.mxu0 0.0
    %351 = vmatpush.msra.mxu0 0.0
    %352 = vmatpush.msra.mxu0 0.0
    %353 = vmatpush.msra.mxu0 0.0
    %354 = vmatpush.msra.mxu0 0.0
    %355 = vmatpush.msra.mxu0 0.0
    %356 = vmatpush.msra.mxu0 0.0
    %357 = vmatpush.msra.mxu0 0.0
    %358 = vmatpush.msra.mxu0 %v308
    %359 = vmatpush.msra.mxu0 %v305
    %360 = vmatpush.msra.mxu0 %v302
    %361 = vmatpush.msra.mxu0 %v299
    %362 = vmatmul.f32.gmra.mxu0 %v335
    %v363 = vpop.f32.mrf.mxu0
    %v364 = vadd.f32 %v317, %v363
    %365 = vmatmul.f32.gmra.mxu0 %v338
    %v366 = vpop.f32.mrf.mxu0
    %v367 = vadd.f32 %v322, %v366
    %368 = vmatmul.f32.gmra.mxu0 %v341
    %v369 = vpop.f32.mrf.mxu0
    %v370 = vadd.f32 %v327, %v369
    %371 = vmatmul.f32.gmra.mxu0 %v344
    %v372 = vpop.f32.mrf.mxu0
    %v373 = vadd.f32 %v332, %v372
    %374 = vdwg.mxu0
    %v375 = vld [vmem:[%s9] sm:$0xf]
    %v376 = vld [vmem:[%s10] sm:$0xf]
    %378 = vset.pattern.permute.xlu0 0
    %379 = vperm.xlu0 %378, %v376
    %v380 = vpop.permute.xlu0 %379
    %v383 = vsel %vm223, %v375, 0
    %385 = vmatpush.msra.mxu0 0.0
    %386 = vmatpush.msra.mxu0 0.0
    %387 = vmatpush.msra.mxu0 0.0
    %388 = vmatpush.msra.mxu0 0.0
    %389 = vmatpush.msra.mxu0 0.0
    %390 = vmatpush.msra.mxu0 0.0
    %391 = vmatpush.msra.mxu0 0.0
    %392 = vmatpush.msra.mxu0 0.0
    %393 = vmatpush.msra.mxu0 0.0
    %394 = vmatpush.msra.mxu0 0.0
    %395 = vmatpush.msra.mxu0 0.0
    %396 = vmatpush.msra.mxu0 0.0
    %397 = vmatpush.msra.mxu0 %v373
    %398 = vmatpush.msra.mxu0 %v370
    %399 = vmatpush.msra.mxu0 %v367
    %400 = vmatpush.msra.mxu0 %v364
    %401 = vmatmul.f32.gmra.mxu0 %v383
    %v402 = vpop.f32.mrf.mxu0
    %v403 = vadd.f32 %v380, %v402
    %404 = vdwg.mxu0
    %405 = vst [vmem:[#allocation2] sm:$0xf] %v403
    %vm406 = vcmask 1043456
    %v407 = vsel %vm406, %v403, -inf
    %v408 = vrot.slane %v407, 4
    %v409 = vmax.f32 %v407, %v408
    %v410 = vrot.slane %v409, 2
    %v411 = vmax.f32 %v409, %v410
    %v412 = vrot.slane %v411, 1
    %v413 = vmax.f32 %v411, %v412
    %v414 = vsub.f32 %v403, %v413
    %v415 = vmul.f32 %v414, 1.442695
    %v416 = vpow.pop %v415
    %v417 = vsel %vm406, %v416, 0.0
    %v418 = vrot.slane %v417, 4
    %v419 = vadd.f32 %v417, %v418
    %v420 = vrot.slane %v419, 2
    %v421 = vadd.f32 %v419, %v420
    %v422 = vrot.slane %v421, 1
    %v423 = vadd.f32 %v421, %v422
    %v424 = vrcp.pop %v423
    %v425 = vmul.f32 %v423, %v424
    %v426 = vsub.f32 1.0, %v425
    %v427 = vmul.f32 %v424, %v426
    %v428 = vadd.f32 %v424, %v427
    %vm429 = vweird.f32 %v423
    %vm430 = vweird.f32 %v424
    %vm431 = vmor %vm429, %vm430
    %v432 = vsel %vm431, %v424, %v428
    %v433 = vand.u32 2147483647, %v423
    %vm434 = vcmp.eq.f32.partialorder %v433, 8.507059e+37
    %v435 = vand.u32 %v423, 2147483648
    %v436 = vor.u32 1.1754944e-38, %v435
    %v437 = vsel %vm434, %v436, %v432
    %v438 = vmul.f32 %v416, %v437
    %439 = vst [vmem:[#allocation4] sm:$0xf] %v438
    %v440 = vld [vmem:[%s2] sm:$0xff]
    %v441 = vld [vmem:[%s2 + $0x8] sm:$0xff]
    %v442 = vld [vmem:[%s2 + $0x10] sm:$0xff]
    %v443 = vld [vmem:[%s2 + $0x18] sm:$0xff]
    %v444 = vld [vmem:[%s2 + $0x20] sm:$0xff]
    %v445 = vld [vmem:[%s2 + $0x28] sm:$0xff]
    %v446 = vld [vmem:[%s2 + $0x30] sm:$0xff]
    %v447 = vld [vmem:[%s2 + $0x38] sm:$0xff]
    %v448 = vld [vmem:[%s2 + $0x40] sm:$0xff]
    %v449 = vld [vmem:[%s2 + $0x48] sm:$0xff]
    %v450 = vld [vmem:[%s2 + $0x50] sm:$0xff]
    %v451 = vld [vmem:[%s2 + $0x58] sm:$0xff]
    %v452 = vld [vmem:[%s2 + $0x60] sm:$0xff]
    %v453 = vld [vmem:[%s2 + $0x68] sm:$0xff]
    %v454 = vld [vmem:[%s2 + $0x70] sm:$0xff]
    %v455 = vld [vmem:[%s2 + $0x78] sm:$0xff]
    %456 = vmatpush.msra.mxu0 %v455
    %457 = vmatpush.msra.mxu0 %v454
    %458 = vmatpush.msra.mxu0 %v453
    %459 = vmatpush.msra.mxu0 %v452
    %460 = vmatpush.msra.mxu0 %v451
    %461 = vmatpush.msra.mxu0 %v450
    %462 = vmatpush.msra.mxu0 %v449
    %463 = vmatpush.msra.mxu0 %v448
    %464 = vmatpush.msra.mxu0 %v447
    %465 = vmatpush.msra.mxu0 %v446
    %466 = vmatpush.msra.mxu0 %v445
    %467 = vmatpush.msra.mxu0 %v444
    %468 = vmatpush.msra.mxu0 %v443
    %469 = vmatpush.msra.mxu0 %v442
    %470 = vmatpush.msra.mxu0 %v441
    %471 = vmatpush.msra.mxu0 %v440
    %472 = vmatmul.f32.gmra.mxu0 %v59
    %v473 = vpop.f32.mrf.mxu0
    %v474 = vadd.f32 0.0, %v473
    %475 = vmatmul.f32.gmra.mxu0 %v60
    %v476 = vpop.f32.mrf.mxu0
    %v477 = vadd.f32 0.0, %v476
    %478 = vdwg.mxu0
    %vm479 = vcmask 31744
    %480 = vst.msk [vmem:[%s13] sm:$0xff] %vm479, %v474
    %481 = vst.msk [vmem:[%s13 + $0x8] sm:$0xff] %vm479, %v477
    // Predicated region
    $region46: #{_forward_fused.1} parent=1 // pred_check
      _
    $region47: #{_forward_fused.1} parent=1 // pred_check_branch
      %483 = sbr.rel (0) target = $region49
    $region48: #{_forward_fused.1} parent=1 // pred_region
      %485 = vsyncadd [#allocation3], 0
      %s487 = sshll.u32 [#allocation2], 4
      %s488 = int_to_ptr.vmem [resolvable:$true] %s487
      %s489 = sshll.u32 %s11, 4
      %s490 = int_to_ptr.hbm [resolvable:$true] %s489
      %492 = dma.vmem_to_hbm [thread:$0]  %s488, 64, %s490, [#allocation3]
    $region49: #{_forward_fused.1} parent=1 // pred_fallthru
      _
    // Predicated region
    $region50: #{_forward_fused.1} parent=1 // pred_check
      _
    $region51: #{_forward_fused.1} parent=1 // pred_check_branch
      %494 = sbr.rel (0) target = $region53
    $region52: #{_forward_fused.1} parent=1 // pred_region
      %496 = vsyncadd [#allocation5], 0
      %s498 = sshll.u32 [#allocation4], 4
      %s499 = int_to_ptr.vmem [resolvable:$true] %s498
      %s500 = sshll.u32 %s12, 4
      %s501 = int_to_ptr.hbm [resolvable:$true] %s500
      %503 = dma.vmem_to_hbm [thread:$0]  %s499, 64, %s501, [#allocation5]
    $region53: #{_forward_fused.1} parent=1 // pred_fallthru
      _
    // Predicated region
    $region54: #{_forward_fused.1} parent=1 // pred_check
      _
    $region55: #{_forward_fused.1} parent=1 // pred_check_branch
      %505 = sbr.rel (0) target = $region57
    $region56: #{_forward_fused.1} parent=1 // pred_region
      _
    $region57: #{_forward_fused.1} parent=1 // pred_fallthru
      _
    // Predicated region
    $region58: #{_forward_fused.1} parent=1 // pred_check
      _
    $region59: #{_forward_fused.1} parent=1 // pred_check_branch
      %507 = sbr.rel (0) target = $region61
    $region60: #{_forward_fused.1} parent=1 // pred_region
      %509 = dma.done [#allocation3], 64
    $region61: #{_forward_fused.1} parent=1 // pred_fallthru
      _
    // Predicated region
    $region62: #{_forward_fused.1} parent=1 // pred_check
      _
    $region63: #{_forward_fused.1} parent=1 // pred_check_branch
      %511 = sbr.rel (0) target = $region65
    $region64: #{_forward_fused.1} parent=1 // pred_region
      %513 = dma.done [#allocation5], 64
    $region65: #{_forward_fused.1} parent=1 // pred_fallthru
      _
    // Predicated region
    $region66: #{_forward_fused.1} parent=1 // pred_check
      _
    $region67: #{_forward_fused.1} parent=1 // pred_check_branch
      %515 = sbr.rel (0) target = $region69
    $region68: #{_forward_fused.1} parent=1 // pred_region
      _
    $region69: #{_forward_fused.1} parent=1 // pred_fallthru
      _
    %516 = vsyncpa [#allocation3], 1
    %517 = vsyncpa [#allocation5], 1

</llo_original>
